<compile_context>
chip_gen: v6e
topology: v6e:2x2x1
jax: 0.10.0
libtpu: 0.0.40
codegen_flags: <defaults>
</compile_context>

<pallas_src>
import jax
import jax.numpy as jnp
from jax.experimental import pallas as pl
from jax.experimental.pallas import tpu as pltpu

EPS = 1e-8          # torch.nn.functional.cosine_similarity default eps
C_OUT = 8           # class (output) dim, padded 5 -> 8 (block dim == full dim)
MAX_BLOCK_B = 4096  # 2 x (4096*256*4B) input bufs ~ 8 MiB << 16 MiB v5e scoped VMEM


def _round_up(x, m):
    return ((x + m - 1) // m) * m


def _cosine_sim_kernel(fea_ref, crep_t_ref, out_ref):
    """Cosine similarity of every fea row against every (pre-normalized) class rep.

    fea_ref    : [TB, 256]  f32   (batch tile; last tile may be ragged)
    crep_t_ref : [256, 8]   bf16  (pre-transposed, unit-norm class reps,
                                   zero-padded from 5 to 8 classes)
    out_ref    : [TB, 8]    f32
    """
    fea = fea_ref[...]                                           # f32 [TB, 256]
    # Row norms from true f32 values; rsqrt goes to the EUP slot (no VALU divide).
    sq = jnp.sum(fea * fea, axis=-1, keepdims=True)              # [TB, 1]
    inv_fn = jax.lax.rsqrt(jnp.maximum(sq, EPS * EPS))           # = 1/max(||fea||, EPS)
    # MXU matmul in bf16 with f32 accumulation; class norms already folded in.
    dots = jax.lax.dot_general(
        fea.astype(jnp.bfloat16), crep_t_ref[...],
        dimension_numbers=(((1,), (0,)), ((), ())),
        preferred_element_type=jnp.float32)                      # [TB, 8]
    out_ref[...] = dots * inv_fn


def init_params(key):
    """Deterministic synthetic parameters (shapes from the module __init__)."""
    k_tab, k_w, k_b = jax.random.split(key, 3)
    # TODO(synk): Bio_ClinicalBERT (BertModel + BertTokenizer) has no Pallas
    # equivalent; its per-label CLS output is replaced by a deterministic
    # synthetic table indexed by label (labels are restricted to 0..4).
    class_cls_table = jax.random.normal(k_tab, (5, 768), dtype=jnp.float32)
    # dimension_reducer: nn.Linear(768, 256); stored as [in, out]
    w_red = jax.random.normal(k_w, (768, 256), dtype=jnp.float32) * 0.02
    b_red = jax.random.normal(k_b, (1, 256), dtype=jnp.float32) * 0.02
    # NOTE: self.logits / self.logits_simple are defined in __init__ but never
    # used in forward(), so they are intentionally omitted.
    return {"class_cls_table": class_cls_table, "w_red": w_red, "b_red": b_red}


def _choose_block_b(B, block_b):
    b_al = _round_up(B, 8)
    if block_b is not None:
        return _round_up(min(block_b, b_al), 8)
    if b_al >= 16:
        # >= 2 grid steps so the ("parallel",) batch axis can be split across
        # both TensorCores on v7x; cap at MAX_BLOCK_B for VMEM / DMA sizing.
        return min(MAX_BLOCK_B, _round_up(pl.cdiv(b_al, 2), 8))
    return b_al


def target_classifier_forward(fea_concat, labels, params, block_b=None):
    B, D = fea_concat.shape
    n_classes = min(5, B)

    # ---- glue (plain JAX, O(5) work): prompts -> frozen BERT CLS -> Linear ----
    # Only the first min(5, B) labels contribute (faithful to the torch zip:
    # class j's representation comes from labels[j]).
    cls = params["class_cls_table"][labels[:n_classes]]              # [C, 768]
    class_rep = cls @ params["w_red"] + params["b_red"]              # [C, 256]
    inv_cn = 1.0 / jnp.maximum(
        jnp.linalg.norm(class_rep, axis=-1, keepdims=True), EPS)     # [C, 1]
    crep_normed = class_rep * inv_cn                                 # f32, norm folded
    # Pre-transpose + zero-pad classes to C_OUT; bf16 for the MXU dot.
    crep_t = (jnp.zeros((D, C_OUT), jnp.float32)
              .at[:, :n_classes].set(crep_normed.T)).astype(jnp.bfloat16)

    tb = _choose_block_b(B, block_b)
    grid = (pl.cdiv(B, tb),)

    cost = pl.CostEstimate(
        flops=2 * B * D * C_OUT,
        transcendentals=B,                               # one rsqrt per row
        bytes_accessed=B * D * 4 + D * C_OUT * 2 + B * C_OUT * 4)

    out = pl.pallas_call(
        _cosine_sim_kernel,
        out_shape=jax.ShapeDtypeStruct((B, C_OUT), jnp.float32),
        grid=grid,
        in_specs=[
            pl.BlockSpec((tb, D), lambda i: (i, 0)),        # fea tile (pipelined)
            pl.BlockSpec((D, C_OUT), lambda i: (0, 0)),     # class reps (resident)
        ],
        out_specs=pl.BlockSpec((tb, C_OUT), lambda i: (i, 0)),
        compiler_params=pltpu.CompilerParams(
            dimension_semantics=("parallel",)),
        cost_estimate=cost,
    )(fea_concat.astype(jnp.float32), crep_t)

    return out[:, :n_classes]


def _reference_f32(fea_concat, labels, params):
    """Pure-f32 semantic reference (mirrors the torch forward)."""
    C = min(5, fea_concat.shape[0])
    cls = params["class_cls_table"][labels[:C]]
    class_rep = cls @ params["w_red"] + params["b_red"]
    dots = fea_concat @ class_rep.T
    fn = jnp.maximum(jnp.linalg.norm(fea_concat, axis=-1, keepdims=True), EPS)
    cn = jnp.maximum(jnp.linalg.norm(class_rep, axis=-1)[None, :], EPS)
    return dots / (fn * cn)


def _reference_mixed(fea_concat, labels, params):
    """Reference mirroring the kernel's arithmetic (f32 norms, bf16 MXU dot)."""
    C = min(5, fea_concat.shape[0])
    cls = params["class_cls_table"][labels[:C]]
    class_rep = cls @ params["w_red"] + params["b_red"]
    inv_cn = 1.0 / jnp.maximum(
        jnp.linalg.norm(class_rep, axis=-1, keepdims=True), EPS)
    crep_bf = (class_rep * inv_cn).astype(jnp.bfloat16)              # [C, 256]
    dots = jnp.dot(fea_concat.astype(jnp.bfloat16), crep_bf.T,
                   preferred_element_type=jnp.float32)               # [B, C]
    sq = jnp.sum(fea_concat * fea_concat, axis=-1, keepdims=True)
    inv_fn = jax.lax.rsqrt(jnp.maximum(sq, EPS * EPS))
    return dots * inv_fn


if __name__ == "__main__":
    key = jax.random.PRNGKey(0)
    k_params, k_fea1, k_fea2 = jax.random.split(key, 3)
    params = init_params(k_params)

    # --- test 1: small batch (B=6, single ragged 8-row tile) ---
    B1 = 6
    fea1 = jax.random.normal(k_fea1, (B1, 2 * 128), dtype=jnp.float32)
    labels1 = jnp.array([0, 1, 2, 3, 4, 0], dtype=jnp.int32)

    pred1 = jax.block_until_ready(target_classifier_forward(fea1, labels1, params))
    assert pred1.shape == (B1, 5), pred1.shape
    # exact-path check (same mixed-precision arithmetic)
    ref1_mixed = _reference_mixed(fea1, labels1, params)
    assert jnp.allclose(pred1, ref1_mixed, atol=1e-4, rtol=1e-4), (
        float(jnp.max(jnp.abs(pred1 - ref1_mixed))))
    # semantic (pure-f32) check; bf16 dot bounds the error well below 2e-2
    ref1_f32 = _reference_f32(fea1, labels1, params)
    assert jnp.allclose(pred1, ref1_f32, atol=2e-2, rtol=2e-2), (
        float(jnp.max(jnp.abs(pred1 - ref1_f32))))

    # --- test 2: multi-step parallel batch grid with ragged tail (20 = 2*8+4) ---
    B2 = 20
    fea2 = jax.random.normal(k_fea2, (B2, 2 * 128), dtype=jnp.float32)
    labels2 = (jnp.arange(B2, dtype=jnp.int32) % 5).astype(jnp.int32)

    pred2 = jax.block_until_ready(
        target_classifier_forward(fea2, labels2, params, block_b=8))
    assert pred2.shape == (B2, 5), pred2.shape
    ref2_mixed = _reference_mixed(fea2, labels2, params)
    assert jnp.allclose(pred2, ref2_mixed, atol=1e-4, rtol=1e-4), (
        float(jnp.max(jnp.abs(pred2 - ref2_mixed))))
    ref2_f32 = _reference_f32(fea2, labels2, params)
    assert jnp.allclose(pred2, ref2_f32, atol=2e-2, rtol=2e-2), (
        float(jnp.max(jnp.abs(pred2 - ref2_f32))))

    # --- test 3: default (auto) tile selection path, B >= 16 -> >= 2 grid steps ---
    pred3 = jax.block_until_ready(target_classifier_forward(fea2, labels2, params))
    assert pred3.shape == (B2, 5), pred3.shape
    assert jnp.allclose(pred3, ref2_mixed, atol=1e-4, rtol=1e-4), (
        float(jnp.max(jnp.abs(pred3 - ref2_mixed))))

    print("KERNEL_OK")
</pallas_src>

<mosaic_0001>
module attributes {stable_mosaic.version = 11 : i64} {
  func.func @_cosine_sim_kernel(%arg0: i32, %arg1: memref<8x256xf32, #tpu.memory_space<vmem>>, %arg2: memref<256x8xbf16, #tpu.memory_space<vmem>>, %arg3: memref<8x8xf32, #tpu.memory_space<vmem>>) attributes {dimension_semantics = [#tpu.dimension_semantics<parallel>], iteration_bounds = array<i64: 1>, scalar_prefetch = 0 : i64, scratch_operands = 0 : i64, tpu.core_type = #tpu.core_type<tc>, window_params = [{transform_indices = @transform_0, window_bounds = array<i64: 8, 256>}, {pipeline_mode = #tpu.pipeline_mode<synchronous>, transform_indices = @transform_1, window_bounds = array<i64: 256, 8>}, {transform_indices = @transform_2, window_bounds = array<i64: 8, 8>}]} {
    %c0 = arith.constant 0 : index
    %c0_0 = arith.constant 0 : index
    %0 = vector.load %arg1[%c0, %c0_0] : memref<8x256xf32, #tpu.memory_space<vmem>>, vector<8x256xf32>
    %1 = arith.mulf %0, %0 : vector<8x256xf32>
    %cst = arith.constant dense<0.000000e+00> : vector<8xf32>
    %2 = vector.multi_reduction <add>, %1, %cst [1] : vector<8x256xf32> to vector<8xf32>
    %3 = vector.shape_cast %2 : vector<8xf32> to vector<8x1xf32>
    %cst_1 = arith.constant 1.000000e-16 : f32
    %4 = vector.broadcast %cst_1 : f32 to vector<8x1xf32>
    %5 = arith.maximumf %3, %4 : vector<8x1xf32>
    %6 = math.rsqrt %5 : vector<8x1xf32>
    %7 = arith.truncf %0 : vector<8x256xf32> to vector<8x256xbf16>
    %c0_2 = arith.constant 0 : index
    %c0_3 = arith.constant 0 : index
    %8 = vector.load %arg2[%c0_2, %c0_3] : memref<256x8xbf16, #tpu.memory_space<vmem>>, vector<256x8xbf16>
    %cst_4 = arith.constant dense<0.000000e+00> : vector<8x8xf32>
    %9 = tpu.matmul %7, %8, %cst_4 {dimension_numbers = #tpu.dot_dimension_numbers<[1], [0], [0], [1], [0, 0, 1, 1], [], []>} : vector<8x256xbf16>, vector<256x8xbf16>, vector<8x8xf32> -> vector<8x8xf32>
    %10 = vector.broadcast %6 : vector<8x1xf32> to vector<8x8xf32>
    %11 = arith.mulf %9, %10 : vector<8x8xf32>
    %c0_5 = arith.constant 0 : index
    %c0_6 = arith.constant 0 : index
    %12 = vector.load %arg3[%c0_5, %c0_6] : memref<8x8xf32, #tpu.memory_space<vmem>>, vector<8x8xf32>
    tpu.vector_store %arg3[%c0_5, %c0_6], %11 {strides = array<i32>} : memref<8x8xf32, #tpu.memory_space<vmem>>, vector<8x8xf32>,
    return
  }
  func.func @transform_0(%arg0: i32) -> (i32, i32) {
    %c0_i32 = arith.constant 0 : i32
    %c0_i32_0 = arith.constant 0 : i32
    return %arg0, %c0_i32 : i32, i32
  }
  func.func @transform_1(%arg0: i32) -> (i32, i32) {
    %c0_i32 = arith.constant 0 : i32
    %c0_i32_0 = arith.constant 0 : i32
    %c0_i32_1 = arith.constant 0 : i32
    return %c0_i32, %c0_i32_0 : i32, i32
  }
  func.func @transform_2(%arg0: i32) -> (i32, i32) {
    %c0_i32 = arith.constant 0 : i32
    %c0_i32_0 = arith.constant 0 : i32
    return %arg0, %c0_i32 : i32, i32
  }
}

</mosaic_0001>

<llo_original>
// kernel: tpu_custom_call.1
$region0: #{tpu_custom_call.1}
  #allocation0 [shape = 'u32[]', space=smem, size = 0x4, offset = 0x4, fixed_abs, tag = 'smem constant byte address 0x4 - core index']
  #allocation1 [shape = 'u32[144,128]{1,0:T(1,128)}', space=vmem, size = 0x12000, scoped, tag = 'internal scratch']
  %s0 = inlined_call_operand.vmem [shape: f32[6,256], index: 0, kind: input, shape index: {}]
  %s1 = inlined_call_operand.vmem [shape: bf16[256,8], index: 1, kind: input, shape index: {}]
  %s2 = inlined_call_operand.hbm [shape: f32[6,8], index: 2, kind: output, shape index: {}]
  %s3 = sld [smem:[#allocation0]]
  $region18: #{tpu_custom_call.1} parent=0
    _
  %s5 = ssub.s32 1, %s3
  %s6 = scalar_select 0, %s5, %s3
  $region1: #{tpu_custom_call.1} parent=0
    #allocation2 [shape = 'u8[4096]{0}', space=vmem, size = 0x1000, scoped, tag = 'output window, operand 0, single buffered']
    #allocation3 [shape = 's32[1]{0}', space=sflag, size = 0x4, scoped, tag = 'scoped memory for tpu_custom_call.1']
    %7 = vsyncpa [#allocation3], 0
    // Predicated region
    $region2: #{tpu_custom_call.1} parent=1 // pred_check
      _
    $region3: #{tpu_custom_call.1} parent=1 // pred_check_branch
      %9 = sbr.rel (0) target = $region5
    $region4: #{tpu_custom_call.1} parent=1 // pred_region
      _
    $region5: #{tpu_custom_call.1} parent=1 // pred_fallthru
      _
    // Predicated region
    $region6: #{tpu_custom_call.1} parent=1 // pred_check
      _
    $region7: #{tpu_custom_call.1} parent=1 // pred_check_branch
      %11 = sbr.rel (0) target = $region9
    $region8: #{tpu_custom_call.1} parent=1 // pred_region
      _
    $region9: #{tpu_custom_call.1} parent=1 // pred_fallthru
      _
    %v13 = vld [vmem:[%s0] sm:$0xff]
    %v14 = vld [vmem:[%s0 + $0x8] sm:$0xff]
    %v15 = vmul.f32 %v13, %v13
    %v16 = vmul.f32 %v14, %v14
    %v17 = vadd.f32 %v15, %v16
    %18 = vadd.xlane.f32.xlu0 %v17
    %v19 = vpop.xlane.xlu0 %18
    %v20 = vmax.f32 %v19, 1e-16
    %v21 = vrsqrt.pop %v20
    %v22 = vpack.c.bf16 %v13, %v13
    %v23 = vpack.c.bf16 %v14, %v14
    %v24 = vld [vmem:[%s1] sm:$0xf]
    %v25 = vld [vmem:[%s1 + $0x4] sm:$0xf]
    %v26 = vld [vmem:[%s1 + $0x8] sm:$0xf]
    %v27 = vld [vmem:[%s1 + $0xc] sm:$0xf]
    %v28 = vld [vmem:[%s1 + $0x10] sm:$0xf]
    %v29 = vld [vmem:[%s1 + $0x14] sm:$0xf]
    %v30 = vld [vmem:[%s1 + $0x18] sm:$0xf]
    %v31 = vld [vmem:[%s1 + $0x1c] sm:$0xf]
    %v32 = vld [vmem:[%s1 + $0x20] sm:$0xf]
    %v33 = vld [vmem:[%s1 + $0x24] sm:$0xf]
    %v34 = vld [vmem:[%s1 + $0x28] sm:$0xf]
    %v35 = vld [vmem:[%s1 + $0x2c] sm:$0xf]
    %v36 = vld [vmem:[%s1 + $0x30] sm:$0xf]
    %v37 = vld [vmem:[%s1 + $0x34] sm:$0xf]
    %v38 = vld [vmem:[%s1 + $0x38] sm:$0xf]
    %v39 = vld [vmem:[%s1 + $0x3c] sm:$0xf]
    %v40 = vld [vmem:[%s1 + $0x40] sm:$0xf]
    %v41 = vld [vmem:[%s1 + $0x44] sm:$0xf]
    %v42 = vld [vmem:[%s1 + $0x48] sm:$0xf]
    %v43 = vld [vmem:[%s1 + $0x4c] sm:$0xf]
    %v44 = vld [vmem:[%s1 + $0x50] sm:$0xf]
    %v45 = vld [vmem:[%s1 + $0x54] sm:$0xf]
    %v46 = vld [vmem:[%s1 + $0x58] sm:$0xf]
    %v47 = vld [vmem:[%s1 + $0x5c] sm:$0xf]
    %v48 = vld [vmem:[%s1 + $0x60] sm:$0xf]
    %v49 = vld [vmem:[%s1 + $0x64] sm:$0xf]
    %v50 = vld [vmem:[%s1 + $0x68] sm:$0xf]
    %v51 = vld [vmem:[%s1 + $0x6c] sm:$0xf]
    %v52 = vld [vmem:[%s1 + $0x70] sm:$0xf]
    %v53 = vld [vmem:[%s1 + $0x74] sm:$0xf]
    %v54 = vld [vmem:[%s1 + $0x78] sm:$0xf]
    %v55 = vld [vmem:[%s1 + $0x7c] sm:$0xf]
    %v88 = vunpack.c.l.b16 %v24
    %v89 = vunpack.c.l.b16 %v25
    %v90 = vunpack.c.l.b16 %v26
    %v91 = vunpack.c.l.b16 %v27
    %v92 = vunpack.c.l.b16 %v28
    %v93 = vunpack.c.l.b16 %v29
    %v94 = vunpack.c.l.b16 %v30
    %v95 = vunpack.c.l.b16 %v31
    %v96 = vunpack.c.l.b16 %v32
    %v97 = vunpack.c.l.b16 %v33
    %v98 = vunpack.c.l.b16 %v34
    %v99 = vunpack.c.l.b16 %v35
    %v100 = vunpack.c.l.b16 %v36
    %v101 = vunpack.c.l.b16 %v37
    %v102 = vunpack.c.l.b16 %v38
    %v103 = vunpack.c.l.b16 %v39
    %v104 = vunpack.c.l.b16 %v40
    %v105 = vunpack.c.l.b16 %v41
    %v106 = vunpack.c.l.b16 %v42
    %v107 = vunpack.c.l.b16 %v43
    %v108 = vunpack.c.l.b16 %v44
    %v109 = vunpack.c.l.b16 %v45
    %v110 = vunpack.c.l.b16 %v46
    %v111 = vunpack.c.l.b16 %v47
    %v112 = vunpack.c.l.b16 %v48
    %v113 = vunpack.c.l.b16 %v49
    %v114 = vunpack.c.l.b16 %v50
    %v115 = vunpack.c.l.b16 %v51
    %v116 = vunpack.c.l.b16 %v52
    %v117 = vunpack.c.l.b16 %v53
    %v118 = vunpack.c.l.b16 %v54
    %v119 = vunpack.c.l.b16 %v55
    %v120 = vpack.c.b16 %v89, %v88
    %v121 = vpack.c.b16 %v91, %v90
    %v122 = vpack.c.b16 %v93, %v92
    %v123 = vpack.c.b16 %v95, %v94
    %v124 = vpack.c.b16 %v97, %v96
    %v125 = vpack.c.b16 %v99, %v98
    %v126 = vpack.c.b16 %v101, %v100
    %v127 = vpack.c.b16 %v103, %v102
    %v128 = vpack.c.b16 %v105, %v104
    %v129 = vpack.c.b16 %v107, %v106
    %v130 = vpack.c.b16 %v109, %v108
    %v131 = vpack.c.b16 %v111, %v110
    %v132 = vpack.c.b16 %v113, %v112
    %v133 = vpack.c.b16 %v115, %v114
    %v134 = vpack.c.b16 %v117, %v116
    %v135 = vpack.c.b16 %v119, %v118
    %152 = vmatprep.subr.bf16.mxu0 0
    %153 = vmatpush1.bf16.msra.mxu0 %v127
    %154 = vmatprep.subr.bf16.mxu0 0
    %155 = vmatpush1.bf16.msra.mxu0 %v126
    %156 = vmatprep.subr.bf16.mxu0 0
    %157 = vmatpush1.bf16.msra.mxu0 %v125
    %158 = vmatprep.subr.bf16.mxu0 0
    %159 = vmatpush1.bf16.msra.mxu0 %v124
    %160 = vmatprep.subr.bf16.mxu0 0
    %161 = vmatpush1.bf16.msra.mxu0 %v123
    %162 = vmatprep.subr.bf16.mxu0 0
    %163 = vmatpush1.bf16.msra.mxu0 %v122
    %164 = vmatprep.subr.bf16.mxu0 0
    %165 = vmatpush1.bf16.msra.mxu0 %v121
    %166 = vmatprep.subr.bf16.mxu0 0
    %167 = vmatpush1.bf16.msra.mxu0 %v120
    %168 = vmatprep.subr.bf16.mxu0 0
    %169 = vmatpush2.bf16.msra.mxu0 %v135
    %170 = vmatprep.subr.bf16.mxu0 0
    %171 = vmatpush2.bf16.msra.mxu0 %v134
    %172 = vmatprep.subr.bf16.mxu0 0
    %173 = vmatpush2.bf16.msra.mxu0 %v133
    %174 = vmatprep.subr.bf16.mxu0 0
    %175 = vmatpush2.bf16.msra.mxu0 %v132
    %176 = vmatprep.subr.bf16.mxu0 0
    %177 = vmatpush2.bf16.msra.mxu0 %v131
    %178 = vmatprep.subr.bf16.mxu0 0
    %179 = vmatpush2.bf16.msra.mxu0 %v130
    %180 = vmatprep.subr.bf16.mxu0 0
    %181 = vmatpush2.bf16.msra.mxu0 %v129
    %182 = vmatprep.subr.bf16.mxu0 0
    %183 = vmatpush2.bf16.msra.mxu0 %v128
    %184 = vmatprep.mubr.bf16.mxu0 %v23
    %185 = vmatmul.mubr.bf16.gmra.mxu0 %v22
    %v186 = vpop.f32.mrf.mxu0
    %v187 = vadd.f32 0.0, %v186
    %v188 = vpop.f32.mrf.mxu0
    %v189 = vpop.f32.mrf.mxu0
    %v190 = vpop.f32.mrf.mxu0
    %191 = vdwg.mxu0
    %v192 = vmul.f32 %v187, %v21
    %vm193 = vcmask 64512
    %194 = vst.msk [vmem:[#allocation2] sm:$0xff] %vm193, %v192
    // Predicated region
    $region10: #{tpu_custom_call.1} parent=1 // pred_check
      _
    $region11: #{tpu_custom_call.1} parent=1 // pred_check_branch
      %196 = sbr.rel (0) target = $region13
    $region12: #{tpu_custom_call.1} parent=1 // pred_region
      %s198 = ssub.s32 128, 128
      %199 = vsyncadd [#allocation3], %s198
      %s201 = sshll.u32 [#allocation2], 4
      %s202 = int_to_ptr.vmem [resolvable:$true] %s201
      %204 = dma.vmem_to_hbm [thread:$0]  %s202, 128, %s2, [#allocation3]
    $region13: #{tpu_custom_call.1} parent=1 // pred_fallthru
      _
    // Predicated region
    $region14: #{tpu_custom_call.1} parent=1 // pred_check
      _
    $region15: #{tpu_custom_call.1} parent=1 // pred_check_branch
      %206 = sbr.rel (0) target = $region17
    $region16: #{tpu_custom_call.1} parent=1 // pred_region
      %207 = dma.done [#allocation3], 128
    $region17: #{tpu_custom_call.1} parent=1 // pred_fallthru
      _
    %208 = vsyncpa [#allocation3], 1

</llo_original>
